<compile_context>
chip_gen: v7x
topology: tpu7x:2x2x1
jax: 0.10.0
libtpu: 0.0.40
codegen_flags: <defaults>
</compile_context>

<pallas_src>
import jax
import jax.numpy as jnp
import numpy as np
from jax.experimental import pallas as pl
from jax.experimental.pallas import tpu as pltpu


def _round_up(v, m):
    return (v + m - 1) // m * m


def ub_predictor_kernel(x_ref, w6_ref, b6_ref, w7_ref, b7_ref,
                        wph_ref, bph_ref, out_ref, acc_ref):
    """One (n-tile, k-tile) grid step.

    x_ref:   (tn, tk)     activation tile (1x1 conv already folded into fc6)
    w6_ref:  (tk, H)      fused fc6 weight K-tile
    b6_ref:  (1, H)       fused fc6 bias            (finalize only)
    w7_ref:  (H, H)  b7_ref: (1, H)                 (finalize only)
    wph_ref: (H, O_pad)  bph_ref: (1, O_pad)        fused + lane-padded heads
    out_ref: (tn, O_pad)  lane-dense output slab
    acc_ref: (tn, H) fp32 accumulator, resident across the K axis
    """
    k = pl.program_id(1)

    @pl.when(k == 0)
    def _():
        acc_ref[...] = jnp.zeros_like(acc_ref)

    # fc6 partial product for this K-tile (MXU, fp32 accumulation).
    acc_ref[...] += jnp.dot(x_ref[...], w6_ref[...],
                            preferred_element_type=jnp.float32)

    @pl.when(k == pl.num_programs(1) - 1)
    def _():
        h = jnp.maximum(acc_ref[...] + b6_ref[...], 0.0)                 # fc6 + ReLU
        h = jnp.dot(h, w7_ref[...], preferred_element_type=jnp.float32) + b7_ref[...]
        h = jnp.maximum(h, 0.0)                                          # fc7 + ReLU
        out_ref[...] = jnp.dot(h, wph_ref[...],                          # both heads
                               preferred_element_type=jnp.float32) + bph_ref[...]


def ub_rcnn_predictor(x_nchw, params, *, tn_max=128, tk_max=2048):
    """x_nchw: (N, C, R, R) float32. Returns [ub_w, ub_h] each (N, (PTS+1)*2)."""
    cw, cb, w6, b6, w7, b7, ww, bw, wh, bh = params
    N, C, R, _ = x_nchw.shape
    P = R * R
    K = C * P
    H = w6.shape[1]
    O = ww.shape[1]

    # ---- parameter prep (trace-time XLA, outside the kernel) --------------
    # Fold 1x1 conv into fc6:
    #   fc6(flatten(conv(x))) == x_flat @ W6_fused + b6_fused
    w6_r = w6.reshape(C, P, H)
    w6_fused = jnp.einsum("oc,oph->cph", cw, w6_r).reshape(K, H)
    b6_fused = b6 + jnp.einsum("o,oph->h", cb, w6_r)[None, :]

    # Fuse the two point heads into one matmul; pad to a 128-lane-dense slab.
    O2 = 2 * O
    O_pad = _round_up(O2, 128)
    w_heads = jnp.pad(jnp.concatenate([ww, wh], axis=1), ((0, 0), (0, O_pad - O2)))
    b_heads = jnp.pad(jnp.concatenate([bw, bh], axis=1), ((0, 0), (0, O_pad - O2)))

    # ---- tiling / padding --------------------------------------------------
    tn = min(tn_max, _round_up(N, 8))          # ROI-row tile (multiple of 8)
    tk = min(tk_max, _round_up(K, 128))        # fc6 reduction tile (multiple of 128)
    N_pad = _round_up(N, tn)
    K_pad = _round_up(K, tk)

    x_flat = x_nchw.reshape(N, K)              # channel-major == torch .view(N, -1)
    x_flat = jnp.pad(x_flat, ((0, N_pad - N), (0, K_pad - K)))
    w6_fused = jnp.pad(w6_fused, ((0, K_pad - K), (0, 0)))

    grid = (N_pad // tn, K_pad // tk)

    out = pl.pallas_call(
        ub_predictor_kernel,
        out_shape=jax.ShapeDtypeStruct((N_pad, O_pad), jnp.float32),
        grid_spec=pltpu.PrefetchScalarGridSpec(
            num_scalar_prefetch=0,
            grid=grid,
            in_specs=[
                pl.BlockSpec((tn, tk), lambda i, k: (i, k)),       # x tile
                pl.BlockSpec((tk, H), lambda i, k: (k, 0)),        # fused fc6 W
                pl.BlockSpec((1, H), lambda i, k: (0, 0)),         # fused fc6 b
                pl.BlockSpec((H, H), lambda i, k: (0, 0)),         # fc7 W
                pl.BlockSpec((1, H), lambda i, k: (0, 0)),         # fc7 b
                pl.BlockSpec((H, O_pad), lambda i, k: (0, 0)),     # fused heads W
                pl.BlockSpec((1, O_pad), lambda i, k: (0, 0)),     # fused heads b
            ],
            out_specs=pl.BlockSpec((tn, O_pad), lambda i, k: (i, 0)),
            scratch_shapes=[pltpu.VMEM((tn, H), jnp.float32)],
        ),
        compiler_params=pltpu.CompilerParams(
            dimension_semantics=("parallel", "arbitrary"),
            vmem_limit_bytes=64 * 1024 * 1024,
        ),
    )(x_flat, w6_fused, b6_fused, w7, b7, w_heads, b_heads)

    ub_w = out[:N, :O]
    ub_h = out[:N, O:O2]
    return [ub_w, ub_h]


def init_params(key, C, R, H, n_pts):
    """Deterministic synthetic init mirroring the module's __init__ shapes."""
    in_size = C * R * R
    out_pts = (n_pts + 1) * 2
    ks = jax.random.split(key, 5)

    # bo_input_xy: Conv2d(C, C, 1), kaiming_normal_(fan_out) -> std = sqrt(2 / C)
    cw = jax.random.normal(ks[0], (C, C), jnp.float32) * jnp.sqrt(2.0 / C)
    cb = jnp.zeros((C,), jnp.float32)

    # fc6 / fc7 (make_fc).  Stored pre-transposed (in, out) so forward is x @ W.
    w6 = jax.random.normal(ks[1], (in_size, H), jnp.float32) * (1.0 / jnp.sqrt(in_size))
    b6 = jnp.zeros((1, H), jnp.float32)
    w7 = jax.random.normal(ks[2], (H, H), jnp.float32) * (1.0 / jnp.sqrt(H))
    b7 = jnp.zeros((1, H), jnp.float32)

    # w_points / h_points: normal(std=0.001), bias 0.  Pre-transposed (H, out_pts).
    ww = jax.random.normal(ks[3], (H, out_pts), jnp.float32) * 0.001
    bw = jnp.zeros((1, out_pts), jnp.float32)
    wh = jax.random.normal(ks[4], (H, out_pts), jnp.float32) * 0.001
    bh = jnp.zeros((1, out_pts), jnp.float32)

    # TODO(synk): GAUSSIAN / CONF / DECOUPLE branches not materialized (config off).
    return (cw, cb, w6, b6, w7, b7, ww, bw, wh, bh)


def reference(x_nchw, params):
    """Pure-JAX reference matching the PyTorch forward (unfused params)."""
    cw, cb, w6, b6, w7, b7, ww, bw, wh, bh = params
    N, C, R, _ = x_nchw.shape
    x = x_nchw.reshape(N, C, R * R)
    conv = jnp.einsum("oc,ncp->nop", cw, x) + cb[None, :, None]
    ft = conv.reshape(N, -1)
    h = jax.nn.relu(ft @ w6 + b6)
    h = jax.nn.relu(h @ w7 + b7)
    return [h @ ww + bw, h @ wh + bh]


if __name__ == "__main__":
    N, C, R, H, n_pts = 2, 4, 16, 32, 7
    key = jax.random.PRNGKey(0)
    kx, kp = jax.random.split(key)
    x = jax.random.normal(kx, (N, C, R, R), jnp.float32)
    params = init_params(kp, C, R, H, n_pts)

    # tk_max=256 -> K = C*R*R = 1024 splits into 4 K-tiles, exercising the
    # accumulator init/finalize path of the pipeline at small shapes.
    out = ub_rcnn_predictor(x, params, tk_max=256)
    jax.block_until_ready(out)

    ref = reference(x, params)
    for o, r in zip(out, ref):
        np.testing.assert_allclose(np.asarray(o), np.asarray(r), rtol=1e-4, atol=1e-5)

    print("KERNEL_OK")
</pallas_src>

<mosaic_0001>
module attributes {stable_mosaic.version = 11 : i64} {
  func.func @ub_predictor_kernel(%arg0: i32, %arg1: i32, %arg2: memref<8x256xf32, #tpu.memory_space<vmem>>, %arg3: memref<256x32xf32, #tpu.memory_space<vmem>>, %arg4: memref<1x32xf32, #tpu.memory_space<vmem>>, %arg5: memref<32x32xf32, #tpu.memory_space<vmem>>, %arg6: memref<1x32xf32, #tpu.memory_space<vmem>>, %arg7: memref<32x128xf32, #tpu.memory_space<vmem>>, %arg8: memref<1x128xf32, #tpu.memory_space<vmem>>, %arg9: memref<8x128xf32, #tpu.memory_space<vmem>>, %arg10: memref<8x32xf32, #tpu.memory_space<vmem>>) attributes {dimension_semantics = [#tpu.dimension_semantics<parallel>, #tpu.dimension_semantics<arbitrary>], iteration_bounds = array<i64: 1, 4>, scalar_prefetch = 0 : i64, scratch_operands = 1 : i64, tpu.core_type = #tpu.core_type<tc>, window_params = [{transform_indices = @transform_0, window_bounds = array<i64: 8, 256>}, {transform_indices = @transform_1, window_bounds = array<i64: 256, 32>}, {pipeline_mode = #tpu.pipeline_mode<synchronous>, transform_indices = @transform_2, window_bounds = array<i64: 1, 32>}, {pipeline_mode = #tpu.pipeline_mode<synchronous>, transform_indices = @transform_3, window_bounds = array<i64: 32, 32>}, {pipeline_mode = #tpu.pipeline_mode<synchronous>, transform_indices = @transform_4, window_bounds = array<i64: 1, 32>}, {pipeline_mode = #tpu.pipeline_mode<synchronous>, transform_indices = @transform_5, window_bounds = array<i64: 32, 128>}, {pipeline_mode = #tpu.pipeline_mode<synchronous>, transform_indices = @transform_6, window_bounds = array<i64: 1, 128>}, {transform_indices = @transform_7, window_bounds = array<i64: 8, 128>}]} {
    %c0_i32 = arith.constant 0 : i32
    %0 = arith.cmpi eq, %arg1, %c0_i32 : i32
    %1 = arith.extui %0 : i1 to i32
    %c0_i32_0 = arith.constant 0 : i32
    %2 = arith.cmpi ne, %1, %c0_i32_0 : i32
    scf.if %2 {
      %cst_9 = arith.constant 0.000000e+00 : f32
      %12 = vector.broadcast %cst_9 : f32 to vector<8x32xf32>
      %c0_10 = arith.constant 0 : index
      %c0_11 = arith.constant 0 : index
      %13 = vector.load %arg10[%c0_10, %c0_11] : memref<8x32xf32, #tpu.memory_space<vmem>>, vector<8x32xf32>
      tpu.vector_store %arg10[%c0_10, %c0_11], %12 {strides = array<i32>} : memref<8x32xf32, #tpu.memory_space<vmem>>, vector<8x32xf32>,
    } else {
    }
    %c0 = arith.constant 0 : index
    %c0_1 = arith.constant 0 : index
    %3 = vector.load %arg10[%c0, %c0_1] : memref<8x32xf32, #tpu.memory_space<vmem>>, vector<8x32xf32>
    %c0_2 = arith.constant 0 : index
    %c0_3 = arith.constant 0 : index
    %4 = vector.load %arg2[%c0_2, %c0_3] : memref<8x256xf32, #tpu.memory_space<vmem>>, vector<8x256xf32>
    %c0_4 = arith.constant 0 : index
    %c0_5 = arith.constant 0 : index
    %5 = vector.load %arg3[%c0_4, %c0_5] : memref<256x32xf32, #tpu.memory_space<vmem>>, vector<256x32xf32>
    %cst = arith.constant dense<0.000000e+00> : vector<8x32xf32>
    %6 = tpu.matmul %4, %5, %cst {dimension_numbers = #tpu.dot_dimension_numbers<[1], [0], [0], [1], [0, 0, 1, 1], [], []>} : vector<8x256xf32>, vector<256x32xf32>, vector<8x32xf32> -> vector<8x32xf32>
    %7 = arith.addf %3, %6 : vector<8x32xf32>
    %c0_6 = arith.constant 0 : index
    %c0_7 = arith.constant 0 : index
    %8 = vector.load %arg10[%c0_6, %c0_7] : memref<8x32xf32, #tpu.memory_space<vmem>>, vector<8x32xf32>
    tpu.vector_store %arg10[%c0_6, %c0_7], %7 {strides = array<i32>} : memref<8x32xf32, #tpu.memory_space<vmem>>, vector<8x32xf32>,
    %c3_i32 = arith.constant 3 : i32
    %9 = arith.cmpi eq, %arg1, %c3_i32 : i32
    %10 = arith.extui %9 : i1 to i32
    %c0_i32_8 = arith.constant 0 : i32
    %11 = arith.cmpi ne, %10, %c0_i32_8 : i32
    scf.if %11 {
      %c0_9 = arith.constant 0 : index
      %c0_10 = arith.constant 0 : index
      %12 = vector.load %arg10[%c0_9, %c0_10] : memref<8x32xf32, #tpu.memory_space<vmem>>, vector<8x32xf32>
      %c0_11 = arith.constant 0 : index
      %c0_12 = arith.constant 0 : index
      %13 = vector.load %arg4[%c0_11, %c0_12] : memref<1x32xf32, #tpu.memory_space<vmem>>, vector<1x32xf32>
      %14 = vector.broadcast %13 : vector<1x32xf32> to vector<8x32xf32>
      %15 = arith.addf %12, %14 : vector<8x32xf32>
      %cst_13 = arith.constant 0.000000e+00 : f32
      %16 = vector.broadcast %cst_13 : f32 to vector<8x32xf32>
      %17 = arith.maximumf %15, %16 : vector<8x32xf32>
      %c0_14 = arith.constant 0 : index
      %c0_15 = arith.constant 0 : index
      %18 = vector.load %arg5[%c0_14, %c0_15] : memref<32x32xf32, #tpu.memory_space<vmem>>, vector<32x32xf32>
      %cst_16 = arith.constant dense<0.000000e+00> : vector<8x32xf32>
      %19 = tpu.matmul %17, %18, %cst_16 {dimension_numbers = #tpu.dot_dimension_numbers<[1], [0], [0], [1], [0, 0, 1, 1], [], []>} : vector<8x32xf32>, vector<32x32xf32>, vector<8x32xf32> -> vector<8x32xf32>
      %c0_17 = arith.constant 0 : index
      %c0_18 = arith.constant 0 : index
      %20 = vector.load %arg6[%c0_17, %c0_18] : memref<1x32xf32, #tpu.memory_space<vmem>>, vector<1x32xf32>
      %21 = vector.broadcast %20 : vector<1x32xf32> to vector<8x32xf32>
      %22 = arith.addf %19, %21 : vector<8x32xf32>
      %cst_19 = arith.constant 0.000000e+00 : f32
      %23 = vector.broadcast %cst_19 : f32 to vector<8x32xf32>
      %24 = arith.maximumf %22, %23 : vector<8x32xf32>
      %c0_20 = arith.constant 0 : index
      %c0_21 = arith.constant 0 : index
      %25 = vector.load %arg7[%c0_20, %c0_21] : memref<32x128xf32, #tpu.memory_space<vmem>>, vector<32x128xf32>
      %cst_22 = arith.constant dense<0.000000e+00> : vector<8x128xf32>
      %26 = tpu.matmul %24, %25, %cst_22 {dimension_numbers = #tpu.dot_dimension_numbers<[1], [0], [0], [1], [0, 0, 1, 1], [], []>} : vector<8x32xf32>, vector<32x128xf32>, vector<8x128xf32> -> vector<8x128xf32>
      %c0_23 = arith.constant 0 : index
      %c0_24 = arith.constant 0 : index
      %27 = vector.load %arg8[%c0_23, %c0_24] : memref<1x128xf32, #tpu.memory_space<vmem>>, vector<1x128xf32>
      %28 = vector.broadcast %27 : vector<1x128xf32> to vector<8x128xf32>
      %29 = arith.addf %26, %28 : vector<8x128xf32>
      %c0_25 = arith.constant 0 : index
      %c0_26 = arith.constant 0 : index
      %30 = vector.load %arg9[%c0_25, %c0_26] : memref<8x128xf32, #tpu.memory_space<vmem>>, vector<8x128xf32>
      tpu.vector_store %arg9[%c0_25, %c0_26], %29 {strides = array<i32>} : memref<8x128xf32, #tpu.memory_space<vmem>>, vector<8x128xf32>,
    } else {
    }
    return
  }
  func.func @transform_0(%arg0: i32, %arg1: i32) -> (i32, i32) {
    %c0_i32 = arith.constant 0 : i32
    return %arg0, %arg1 : i32, i32
  }
  func.func @transform_1(%arg0: i32, %arg1: i32) -> (i32, i32) {
    %c0_i32 = arith.constant 0 : i32
    %c0_i32_0 = arith.constant 0 : i32
    return %arg1, %c0_i32 : i32, i32
  }
  func.func @transform_2(%arg0: i32, %arg1: i32) -> (i32, i32) {
    %c0_i32 = arith.constant 0 : i32
    %c0_i32_0 = arith.constant 0 : i32
    %c0_i32_1 = arith.constant 0 : i32
    return %c0_i32, %c0_i32_0 : i32, i32
  }
  func.func @transform_3(%arg0: i32, %arg1: i32) -> (i32, i32) {
    %c0_i32 = arith.constant 0 : i32
    %c0_i32_0 = arith.constant 0 : i32
    %c0_i32_1 = arith.constant 0 : i32
    return %c0_i32, %c0_i32_0 : i32, i32
  }
  func.func @transform_4(%arg0: i32, %arg1: i32) -> (i32, i32) {
    %c0_i32 = arith.constant 0 : i32
    %c0_i32_0 = arith.constant 0 : i32
    %c0_i32_1 = arith.constant 0 : i32
    return %c0_i32, %c0_i32_0 : i32, i32
  }
  func.func @transform_5(%arg0: i32, %arg1: i32) -> (i32, i32) {
    %c0_i32 = arith.constant 0 : i32
    %c0_i32_0 = arith.constant 0 : i32
    %c0_i32_1 = arith.constant 0 : i32
    return %c0_i32, %c0_i32_0 : i32, i32
  }
  func.func @transform_6(%arg0: i32, %arg1: i32) -> (i32, i32) {
    %c0_i32 = arith.constant 0 : i32
    %c0_i32_0 = arith.constant 0 : i32
    %c0_i32_1 = arith.constant 0 : i32
    return %c0_i32, %c0_i32_0 : i32, i32
  }
  func.func @transform_7(%arg0: i32, %arg1: i32) -> (i32, i32) {
    %c0_i32 = arith.constant 0 : i32
    %c0_i32_0 = arith.constant 0 : i32
    return %arg0, %c0_i32 : i32, i32
  }
}

</mosaic_0001>

<llo_original>
// kernel: tpu_custom_call.1
$region0: #{tpu_custom_call.1}
  #allocation0 [shape = 'u32[]', space=smem, size = 0x4, offset = 0x4, fixed_abs, tag = 'smem constant byte address 0x4 - core index']
  #allocation1 [shape = 'u32[144,128]{1,0:T(1,128)}', space=vmem, size = 0x12000, scoped, tag = 'internal scratch']
  #allocation2 [shape = 'f32[8,32]{1,0:T(8,128)}', space=vmem, size = 0x1000, scoped, tag = 'scratch operand']
  %s0 = inlined_call_operand.hbm [shape: f32[8,1024], index: 0, kind: input, shape index: {}]
  %s1 = inlined_call_operand.hbm [shape: f32[1024,32], index: 1, kind: input, shape index: {}]
  %s2 = inlined_call_operand.hbm [shape: f32[1,32], index: 2, kind: input, shape index: {}]
  %s3 = inlined_call_operand.hbm [shape: f32[32,32], index: 3, kind: input, shape index: {}]
  %s4 = inlined_call_operand.hbm [shape: f32[1,32], index: 4, kind: input, shape index: {}]
  %s5 = inlined_call_operand.hbm [shape: f32[32,128], index: 5, kind: input, shape index: {}]
  %s6 = inlined_call_operand.hbm [shape: f32[1,128], index: 6, kind: input, shape index: {}]
  %s7 = inlined_call_operand.hbm [shape: f32[8,128], index: 7, kind: output, shape index: {}]
  %s8 = sld [smem:[#allocation0]]
  $region97: #{tpu_custom_call.1} parent=0
    _
  %s10 = ssub.s32 1, %s8
  %s11 = scalar_select 0, %s10, %s8
  $region1: #{tpu_custom_call.1} parent=0
    #allocation3 [shape = 'u8[16384]{0}', space=vmem, size = 0x4000, scoped, tag = 'input window, operand 0']
    #allocation4 [shape = 's32[2]{0}', space=sflag, size = 0x8, scoped, tag = 'scoped memory for tpu_custom_call.1']
    #allocation5 [shape = 's32[2]{0}', space=sflag, size = 0x8, scoped, tag = 'scoped memory for tpu_custom_call.1']
    #allocation6 [shape = 'u8[262144]{0}', space=vmem, size = 0x40000, scoped, tag = 'input window, operand 1']
    #allocation7 [shape = 's32[2]{0}', space=sflag, size = 0x8, scoped, tag = 'scoped memory for tpu_custom_call.1']
    #allocation8 [shape = 'u8[512]{0}', space=vmem, size = 0x400, scoped, tag = 'input window, operand 2, single buffered']
    #allocation9 [shape = 'u8[16384]{0}', space=vmem, size = 0x4000, scoped, tag = 'input window, operand 3, single buffered']
    #allocation10 [shape = 's32[1]{0}', space=sflag, size = 0x4, scoped, tag = 'scoped memory for tpu_custom_call.1']
    #allocation11 [shape = 'u8[512]{0}', space=vmem, size = 0x400, scoped, tag = 'input window, operand 4, single buffered']
    #allocation12 [shape = 'u8[16384]{0}', space=vmem, size = 0x4000, scoped, tag = 'input window, operand 5, single buffered']
    #allocation13 [shape = 's32[1]{0}', space=sflag, size = 0x4, scoped, tag = 'scoped memory for tpu_custom_call.1']
    #allocation14 [shape = 'u8[512]{0}', space=vmem, size = 0x400, scoped, tag = 'input window, operand 6, single buffered']
    #allocation15 [shape = 'u8[4096]{0}', space=vmem, size = 0x1000, scoped, tag = 'output window, operand 0, single buffered']
    %12 = vsyncpa [#allocation4], 0
    %s13 = scalar_lea.sflag [#allocation4], 1
    %14 = vsyncpa %s13, 0
    %15 = vsyncpa [#allocation7], 0
    %s16 = scalar_lea.sflag [#allocation7], 1
    %17 = vsyncpa %s16, 0
    %18 = vsyncpa [#allocation10], 0
    %19 = vsyncpa [#allocation13], 0
    %20 = vsyncpa [#allocation5], 0
    loop: start=0, step=1, limit=6
    $region2: #{tpu_custom_call.1} parent=1 // loop_pre_header
      _
    $region3: #{tpu_custom_call.1} parent=1 // loop_header
      %s22 = sphi 0, %s26
      %p23 = scmp.ge.s32.totalorder %s22, 6
      %s29 = sphi 0, %s41
      %s30 = sphi 0, %s37
      %s31 = sphi 0, %s29
      %s32 = sphi 0, %s30
      %s33 = sphi 0, %s31
      %s34 = sphi 0, %s32
      %s46 = sphi 0, %s48
      %s49 = sphi 0, %s46
      %s50 = sphi 0, %s49
      %s66 = sphi 0, %s50
      %s72 = sphi 0, %s74
      %s75 = sphi 0, %s72
      %s76 = sphi 0, %s75
      %s92 = sphi 0, %s76
      %s96 = sphi 0, %s96
      %s98 = sphi 0, %s96
      %s99 = sphi 0, %s98
      %s113 = sphi 0, %s99
      %s117 = sphi 0, %s117
      %s119 = sphi 0, %s117
      %s120 = sphi 0, %s119
      %s134 = sphi 0, %s120
      %s138 = sphi 0, %s138
      %s140 = sphi 0, %s138
      %s141 = sphi 0, %s140
      %s155 = sphi 0, %s141
      %s159 = sphi 0, %s159
      %s161 = sphi 0, %s159
      %s162 = sphi 0, %s161
      %s176 = sphi 0, %s162
      %s180 = sphi 0, %s180
      %s182 = sphi 0, %s180
      %s183 = sphi 0, %s182
      %s197 = sphi 0, %s183
      %s203 = sphi 0, %s205
      %s206 = sphi 0, %s203
      %s207 = sphi 0, %s206
      %s223 = sphi 0, %s207
    $region4: #{tpu_custom_call.1} parent=1 // loop_header_branch
      %25 = sbr.rel (%p23) target = $region8
    $region5: #{tpu_custom_call.1} parent=1 // loop_body
      %s27 = ssub.s32 %s22, 1
      %s28 = ssub.s32 %s22, 2
      %s35 = sadd.s32 1, %s30
      %p36 = scmp.ge.s32.totalorder %s35, 4
      %s37 = scalar_select %p36, 0, %s35
      %s38 = sadd.s32 1, %s29
      %s39 = scalar_select %p36, %s38, %s29
      %p40 = scmp.ge.s32.totalorder %s39, 1
      %s41 = scalar_select %p40, 0, %s39
      %s42 = ssub.s32 %s29, %s41
      %s43 = ssub.s32 %s30, %s37
      %s44 = sor.u32 %s42, %s43
      %p45 = scmp.eq.s32.totalorder %s44, 0
      %s47 = sadd.s32 %s46, 1
      %s48 = scalar_select %p45, %s46, %s47
      %p51 = pneg %p45
      %p52 = scmp.eq.s32.totalorder %s22, 3
      %p53 = por %p51, %p52
      %p54 = scmp.ne.s32.totalorder %s46, %s49
      %p55 = scmp.eq.s32.totalorder %s22, 0
      %p56 = por %p54, %p55
      %p57 = scmp.ne.s32.totalorder %s46, %s49
      %p58 = scmp.eq.s32.totalorder %s27, 3
      %p59 = por %p57, %p58
      %p60 = scmp.ne.s32.totalorder %s49, %s50
      %p61 = scmp.eq.s32.totalorder %s27, 0
      %p62 = por %p60, %p61
      %p63 = scmp.ne.s32.totalorder %s49, %s50
      %p64 = scmp.eq.s32.totalorder %s28, 3
      %p65 = por %p63, %p64
      %p67 = scmp.ne.s32.totalorder %s50, %s66
      %p68 = scmp.eq.s32.totalorder %s28, 0
      %p69 = por %p67, %p68
      %s70 = ssub.s32 %s30, %s37
      %p71 = scmp.eq.s32.totalorder %s70, 0
      %s73 = sadd.s32 %s72, 1
      %s74 = scalar_select %p71, %s72, %s73
      %p77 = pneg %p71
      %p78 = scmp.eq.s32.totalorder %s22, 3
      %p79 = por %p77, %p78
      %p80 = scmp.ne.s32.totalorder %s72, %s75
      %p81 = scmp.eq.s32.totalorder %s22, 0
      %p82 = por %p80, %p81
      %p83 = scmp.ne.s32.totalorder %s72, %s75
      %p84 = scmp.eq.s32.totalorder %s27, 3
      %p85 = por %p83, %p84
      %p86 = scmp.ne.s32.totalorder %s75, %s76
      %p87 = scmp.eq.s32.totalorder %s27, 0
      %p88 = por %p86, %p87
      %p89 = scmp.ne.s32.totalorder %s75, %s76
      %p90 = scmp.eq.s32.totalorder %s28, 3
      %p91 = por %p89, %p90
      %p93 = scmp.ne.s32.totalorder %s76, %s92
      %p94 = scmp.eq.s32.totalorder %s28, 0
      %p95 = por %p93, %p94
      %s97 = sadd.s32 %s96, 1
      %p100 = scmp.eq.s32.totalorder %s22, 3
      %p101 = scmp.ne.s32.totalorder %s96, %s98
      %p102 = scmp.eq.s32.totalorder %s22, 0
      %p103 = por %p101, %p102
      %p104 = scmp.ne.s32.totalorder %s96, %s98
      %p105 = scmp.eq.s32.totalorder %s27, 3
      %p106 = por %p104, %p105
      %p107 = scmp.ne.s32.totalorder %s98, %s99
      %p108 = scmp.eq.s32.totalorder %s27, 0
      %p109 = por %p107, %p108
      %p110 = scmp.ne.s32.totalorder %s98, %s99
      %p111 = scmp.eq.s32.totalorder %s28, 3
      %p112 = por %p110, %p111
      %p114 = scmp.ne.s32.totalorder %s99, %s113
      %p115 = scmp.eq.s32.totalorder %s28, 0
      %p116 = por %p114, %p115
      %s118 = sadd.s32 %s117, 1
      %p121 = scmp.eq.s32.totalorder %s22, 3
      %p122 = scmp.ne.s32.totalorder %s117, %s119
      %p123 = scmp.eq.s32.totalorder %s22, 0
      %p124 = por %p122, %p123
      %p125 = scmp.ne.s32.totalorder %s117, %s119
      %p126 = scmp.eq.s32.totalorder %s27, 3
      %p127 = por %p125, %p126
      %p128 = scmp.ne.s32.totalorder %s119, %s120
      %p129 = scmp.eq.s32.totalorder %s27, 0
      %p130 = por %p128, %p129
      %p131 = scmp.ne.s32.totalorder %s119, %s120
      %p132 = scmp.eq.s32.totalorder %s28, 3
      %p133 = por %p131, %p132
      %p135 = scmp.ne.s32.totalorder %s120, %s134
      %p136 = scmp.eq.s32.totalorder %s28, 0
      %p137 = por %p135, %p136
      %s139 = sadd.s32 %s138, 1
      %p142 = scmp.eq.s32.totalorder %s22, 3
      %p143 = scmp.ne.s32.totalorder %s138, %s140
      %p144 = scmp.eq.s32.totalorder %s22, 0
      %p145 = por %p143, %p144
      %p146 = scmp.ne.s32.totalorder %s138, %s140
      %p147 = scmp.eq.s32.totalorder %s27, 3
      %p148 = por %p146, %p147
      %p149 = scmp.ne.s32.totalorder %s140, %s141
      %p150 = scmp.eq.s32.totalorder %s27, 0
      %p151 = por %p149, %p150
      %p152 = scmp.ne.s32.totalorder %s140, %s141
      %p153 = scmp.eq.s32.totalorder %s28, 3
      %p154 = por %p152, %p153
      %p156 = scmp.ne.s32.totalorder %s141, %s155
      %p157 = scmp.eq.s32.totalorder %s28, 0
      %p158 = por %p156, %p157
      %s160 = sadd.s32 %s159, 1
      %p163 = scmp.eq.s32.totalorder %s22, 3
      %p164 = scmp.ne.s32.totalorder %s159, %s161
      %p165 = scmp.eq.s32.totalorder %s22, 0
      %p166 = por %p164, %p165
      %p167 = scmp.ne.s32.totalorder %s159, %s161
      %p168 = scmp.eq.s32.totalorder %s27, 3
      %p169 = por %p167, %p168
      %p170 = scmp.ne.s32.totalorder %s161, %s162
      %p171 = scmp.eq.s32.totalorder %s27, 0
      %p172 = por %p170, %p171
      %p173 = scmp.ne.s32.totalorder %s161, %s162
      %p174 = scmp.eq.s32.totalorder %s28, 3
      %p175 = por %p173, %p174
      %p177 = scmp.ne.s32.totalorder %s162, %s176
      %p178 = scmp.eq.s32.totalorder %s28, 0
      %p179 = por %p177, %p178
      %s181 = sadd.s32 %s180, 1
      %p184 = scmp.eq.s32.totalorder %s22, 3
      %p185 = scmp.ne.s32.totalorder %s180, %s182
      %p186 = scmp.eq.s32.totalorder %s22, 0
      %p187 = por %p185, %p186
      %p188 = scmp.ne.s32.totalorder %s180, %s182
      %p189 = scmp.eq.s32.totalorder %s27, 3
      %p190 = por %p188, %p189
      %p191 = scmp.ne.s32.totalorder %s182, %s183
      %p192 = scmp.eq.s32.totalorder %s27, 0
      %p193 = por %p191, %p192
      %p194 = scmp.ne.s32.totalorder %s182, %s183
      %p195 = scmp.eq.s32.totalorder %s28, 3
      %p196 = por %p194, %p195
      %p198 = scmp.ne.s32.totalorder %s183, %s197
      %p199 = scmp.eq.s32.totalorder %s28, 0
      %p200 = por %p198, %p199
      %s201 = ssub.s32 %s29, %s41
      %p202 = scmp.eq.s32.totalorder %s201, 0
      %s204 = sadd.s32 %s203, 1
      %s205 = scalar_select %p202, %s203, %s204
      %p208 = pneg %p202
      %p209 = scmp.eq.s32.totalorder %s22, 3
      %p210 = por %p208, %p209
      %p211 = scmp.ne.s32.totalorder %s203, %s206
      %p212 = scmp.eq.s32.totalorder %s22, 0
      %p213 = por %p211, %p212
      %p214 = scmp.ne.s32.totalorder %s203, %s206
      %p215 = scmp.eq.s32.totalorder %s27, 3
      %p216 = por %p214, %p215
      %p217 = scmp.ne.s32.totalorder %s206, %s207
      %p218 = scmp.eq.s32.totalorder %s27, 0
      %p219 = por %p217, %p218
      %p220 = scmp.ne.s32.totalorder %s206, %s207
      %p221 = scmp.eq.s32.totalorder %s28, 3
      %p222 = por %p220, %p221
      %p224 = scmp.ne.s32.totalorder %s207, %s223
      %p225 = scmp.eq.s32.totalorder %s28, 0
      %p226 = por %p224, %p225
      %p227 = scmp.le.s32.totalorder 1, %s22
      %p228 = scmp.lt.s32.totalorder %s22, 5
      %p229 = pnand %p227, %p228
      %p230 = pneg %p229
      // Predicated region
      $region9: #{tpu_custom_call.1} parent=5 // pred_check
        _
      $region10: #{tpu_custom_call.1} parent=5 // pred_check_branch
        %232 = sbr.rel (%p229) target = $region12
      $region11: #{tpu_custom_call.1} parent=5 // pred_region
        %s233 = ssub.s32 %s22, 1
        // Predicated region
        $region13: #{tpu_custom_call.1} parent=11 // pred_check
          %p234 = pneg %p109
        $region14: #{tpu_custom_call.1} parent=11 // pred_check_branch
          %236 = sbr.rel (%p234) target = $region16
        $region15: #{tpu_custom_call.1} parent=11 // pred_region
          %s238 = ssub.s32 16, 16
          %239 = vsyncadd [#allocation7], %s238
          %s241 = sshll.u32 [#allocation8], 4
          %s242 = int_to_ptr.vmem [resolvable:$true] %s241
          %244 = dma.hbm_to_vmem [thread:$0]  %s2, 16, %s242, [#allocation7]
        $region16: #{tpu_custom_call.1} parent=11 // pred_fallthru
          _
        // Predicated region
        $region17: #{tpu_custom_call.1} parent=11 // pred_check
          %p245 = pneg %p130
        $region18: #{tpu_custom_call.1} parent=11 // pred_check_branch
          %247 = sbr.rel (%p245) target = $region20
        $region19: #{tpu_custom_call.1} parent=11 // pred_region
          %s249 = ssub.s32 512, 512
          %250 = vsyncadd [#allocation10], %s249
          %s251 = sshll.u32 [#allocation9], 4
          %s252 = int_to_ptr.vmem [resolvable:$true] %s251
          %257 = dma.hbm_to_vmem [thread:$0]  %s3, 512, %s252, [#allocation10], 128, 128, 8
        $region20: #{tpu_custom_call.1} parent=11 // pred_fallthru
          _
        // Predicated region
        $region21: #{tpu_custom_call.1} parent=11 // pred_check
          %p258 = pneg %p151
        $region22: #{tpu_custom_call.1} parent=11 // pred_check_branch
          %260 = sbr.rel (%p258) target = $region24
        $region23: #{tpu_custom_call.1} parent=11 // pred_region
          %s262 = ssub.s32 16, 16
          %263 = vsyncadd [#allocation10], %s262
          %s265 = sshll.u32 [#allocation11], 4
          %s266 = int_to_ptr.vmem [resolvable:$true] %s265
          %268 = dma.hbm_to_vmem [thread:$0]  %s4, 16, %s266, [#allocation10]
        $region24: #{tpu_custom_call.1} parent=11 // pred_fallthru
          _
        // Predicated region
        $region25: #{tpu_custom_call.1} parent=11 // pred_check
          %p269 = pneg %p172
        $region26: #{tpu_custom_call.1} parent=11 // pred_check_branch
          %271 = sbr.rel (%p269) target = $region28
        $region27: #{tpu_custom_call.1} parent=11 // pred_region
          %s273 = ssub.s32 512, 512
          %274 = vsyncadd [#allocation13], %s273
          %s275 = sshll.u32 [#allocation12], 4
          %s276 = int_to_ptr.vmem [resolvable:$true] %s275
          %281 = dma.hbm_to_vmem [thread:$0]  %s5, 512, %s276, [#allocation13], 128, 128, 8
        $region28: #{tpu_custom_call.1} parent=11 // pred_fallthru
          _
        // Predicated region
        $region29: #{tpu_custom_call.1} parent=11 // pred_check
          %p282 = pneg %p193
        $region30: #{tpu_custom_call.1} parent=11 // pred_check_branch
          %284 = sbr.rel (%p282) target = $region32
        $region31: #{tpu_custom_call.1} parent=11 // pred_region
          %s286 = ssub.s32 16, 16
          %287 = vsyncadd [#allocation13], %s286
          %s289 = sshll.u32 [#allocation14], 4
          %s290 = int_to_ptr.vmem [resolvable:$true] %s289
          %292 = dma.hbm_to_vmem [thread:$0]  %s6, 16, %s290, [#allocation13]
        $region32: #{tpu_custom_call.1} parent=11 // pred_fallthru
          _
      $region12: #{tpu_custom_call.1} parent=5 // pred_fallthru
        _
      %p293 = scmp.lt.s32.totalorder %s22, 4
      // Predicated region
      $region33: #{tpu_custom_call.1} parent=5 // pred_check
        %p294 = pneg %p293
      $region34: #{tpu_custom_call.1} parent=5 // pred_check_branch
        %296 = sbr.rel (%p294) target = $region36
      $region35: #{tpu_custom_call.1} parent=5 // pred_region
        // Predicated region
        $region37: #{tpu_custom_call.1} parent=35 // pred_check
          %p297 = pneg %p56
        $region38: #{tpu_custom_call.1} parent=35 // pred_check_branch
          %299 = sbr.rel (%p297) target = $region40
        $region39: #{tpu_custom_call.1} parent=35 // pred_region
          %s300 = sand.u32 %s46, 1
          %s301 = scalar_lea.sflag [#allocation4], %s300
          %s302 = sand.u32 %s46, 1
          %s303 = smul.addr %s302, 16
          %s304 = scalar_lea.vmem [#allocation3], %s303
          %s305 = smul.u32 2, %s30
          %s307 = ssub.s32 256, 256
          %308 = vsyncadd %s301, %s307
          %s309 = smul.addr %s29, 8
          %s310 = sadd.s32 %s305, %s309
          %s311 = smul.addr %s310, 128
          %s312 = scalar_lea.hbm %s0, %s311
          %s314 = sshll.u32 %s304, 4
          %s315 = int_to_ptr.vmem [resolvable:$true] %s314
          %317 = dma.hbm_to_vmem [thread:$0]  %s312, 256, %s315, %s301
        $region40: #{tpu_custom_call.1} parent=35 // pred_fallthru
          _
        // Predicated region
        $region41: #{tpu_custom_call.1} parent=35 // pred_check
          %p318 = pneg %p82
        $region42: #{tpu_custom_call.1} parent=35 // pred_check_branch
          %320 = sbr.rel (%p318) target = $region44
        $region43: #{tpu_custom_call.1} parent=35 // pred_region
          %s321 = sand.u32 %s22, 1
          %s322 = scalar_lea.sflag [#allocation7], %s321
          %s323 = sand.u32 %s72, 1
          %s324 = smul.addr %s323, 256
          %s325 = scalar_lea.vmem [#allocation6], %s324
          %s326 = smul.u32 32, %s30
          %s328 = ssub.s32 4096, 4096
          %329 = vsyncadd %s322, %s328
          %s330 = smul.addr %s326, 128
          %s331 = scalar_lea.hbm %s1, %s330
          %s332 = sshll.u32 %s325, 4
          %s333 = int_to_ptr.vmem [resolvable:$true] %s332
          %338 = dma.hbm_to_vmem [thread:$0]  %s331, 4096, %s333, %s322, 128, 128, 8
        $region44: #{tpu_custom_call.1} parent=35 // pred_fallthru
          _
      $region36: #{tpu_custom_call.1} parent=5 // pred_fallthru
        _
      %p339 = scmp.le.s32.totalorder 1, %s22
      %p340 = scmp.lt.s32.totalorder %s22, 5
      %p341 = pnand %p339, %p340
      %p342 = pneg %p341
      // Predicated region
      $region45: #{tpu_custom_call.1} parent=5 // pred_check
        _
      $region46: #{tpu_custom_call.1} parent=5 // pred_check_branch
        %344 = sbr.rel (%p341) target = $region48
      $region47: #{tpu_custom_call.1} parent=5 // pred_region
        %s345 = ssub.s32 %s22, 1
        %s346 = sand.u32 %s49, 1
        %s347 = scalar_lea.sflag [#allocation4], %s346
        %s348 = sand.u32 %s49, 1
        %s349 = smul.addr %s348, 16
        %s350 = scalar_lea.vmem [#allocation3], %s349
        // Predicated region
        $region49: #{tpu_custom_call.1} parent=47 // pred_check
          %p351 = pneg %p62
        $region50: #{tpu_custom_call.1} parent=47 // pred_check_branch
          %353 = sbr.rel (%p351) target = $region52
        $region51: #{tpu_custom_call.1} parent=47 // pred_region
          %354 = dma.done %s347, 256
        $region52: #{tpu_custom_call.1} parent=47 // pred_fallthru
          _
        %s355 = sand.u32 %s27, 1
        %s356 = scalar_lea.sflag [#allocation7], %s355
        %s357 = sand.u32 %s75, 1
        %s358 = smul.addr %s357, 256
        %s359 = scalar_lea.vmem [#allocation6], %s358
        // Predicated region
        $region53: #{tpu_custom_call.1} parent=47 // pred_check
          %p360 = pneg %p88
        $region54: #{tpu_custom_call.1} parent=47 // pred_check_branch
          %362 = sbr.rel (%p360) target = $region56
        $region55: #{tpu_custom_call.1} parent=47 // pred_region
          %363 = dma.done %s356, 4096
        $region56: #{tpu_custom_call.1} parent=47 // pred_fallthru
          _
        // Predicated region
        $region57: #{tpu_custom_call.1} parent=47 // pred_check
          %p364 = pneg %p109
        $region58: #{tpu_custom_call.1} parent=47 // pred_check_branch
          %366 = sbr.rel (%p364) target = $region60
        $region59: #{tpu_custom_call.1} parent=47 // pred_region
          %367 = dma.done [#allocation7], 16
        $region60: #{tpu_custom_call.1} parent=47 // pred_fallthru
          _
        // Predicated region
        $region61: #{tpu_custom_call.1} parent=47 // pred_check
          %p368 = pneg %p130
        $region62: #{tpu_custom_call.1} parent=47 // pred_check_branch
          %370 = sbr.rel (%p368) target = $region64
        $region63: #{tpu_custom_call.1} parent=47 // pred_region
          %371 = dma.done [#allocation10], 512
        $region64: #{tpu_custom_call.1} parent=47 // pred_fallthru
          _
        // Predicated region
        $region65: #{tpu_custom_call.1} parent=47 // pred_check
          %p372 = pneg %p151
        $region66: #{tpu_custom_call.1} parent=47 // pred_check_branch
          %374 = sbr.rel (%p372) target = $region68
        $region67: #{tpu_custom_call.1} parent=47 // pred_region
          %375 = dma.done [#allocation10], 16
        $region68: #{tpu_custom_call.1} parent=47 // pred_fallthru
          _
        // Predicated region
        $region69: #{tpu_custom_call.1} parent=47 // pred_check
          %p376 = pneg %p172
        $region70: #{tpu_custom_call.1} parent=47 // pred_check_branch
          %378 = sbr.rel (%p376) target = $region72
        $region71: #{tpu_custom_call.1} parent=47 // pred_region
          %379 = dma.done [#allocation13], 512
        $region72: #{tpu_custom_call.1} parent=47 // pred_fallthru
          _
        // Predicated region
        $region73: #{tpu_custom_call.1} parent=47 // pred_check
          %p380 = pneg %p193
        $region74: #{tpu_custom_call.1} parent=47 // pred_check_branch
          %382 = sbr.rel (%p380) target = $region76
        $region75: #{tpu_custom_call.1} parent=47 // pred_region
          %383 = dma.done [#allocation13], 16
        $region76: #{tpu_custom_call.1} parent=47 // pred_fallthru
          _
        %s384 = sand.u32 %s49, 1
        %s385 = scalar_lea.sflag [#allocation4], %s384
        %s386 = sand.u32 %s49, 1
        %s387 = smul.addr %s386, 16
        %s388 = scalar_lea.vmem [#allocation3], %s387
        %p389 = pneg %p62
        %p390 = pneg %p59
        %s391 = sand.u32 %s27, 1
        %s392 = scalar_lea.sflag [#allocation7], %s391
        %s393 = sand.u32 %s75, 1
        %s394 = smul.addr %s393, 256
        %s395 = scalar_lea.vmem [#allocation6], %s394
        %p396 = pneg %p88
        %p397 = pneg %p85
        %p398 = pneg %p109
        %p399 = pneg %p106
        %p400 = pneg %p130
        %p401 = pneg %p127
        %p402 = pneg %p151
        %p403 = pneg %p148
        %p404 = pneg %p172
        %p405 = pneg %p169
        %p406 = pneg %p193
        %p407 = pneg %p190
        %p408 = pneg %p219
        %p409 = pneg %p216
        %s410 = smul.u32 2, %s32
        %s411 = smul.u32 32, %s32
        %p412 = scmp.eq.s32.totalorder %s32, 0
        // Predicated region
        $region77: #{tpu_custom_call.1} parent=47 // pred_check
          %p413 = pneg %p412
        $region78: #{tpu_custom_call.1} parent=47 // pred_check_branch
          %415 = sbr.rel (%p413) target = $region80
        $region79: #{tpu_custom_call.1} parent=47 // pred_region
          %vm416 = vcmask 261120
          %417 = vst.msk [vmem:[#allocation2] sm:$0xff] %vm416, 0.0
        $region80: #{tpu_custom_call.1} parent=47 // pred_fallthru
          _
        %v418 = vld [vmem:[#allocation2] sm:$0xff]
        %v419 = vld [vmem:[%s350] sm:$0xff]
        %v420 = vld [vmem:[%s350 + $0x8] sm:$0xff]
        %v421 = vld [vmem:[%s359] sm:$0xff]
        %v422 = vld [vmem:[%s359 + $0x8] sm:$0xff]
        %v423 = vld [vmem:[%s359 + $0x10] sm:$0xff]
        %v424 = vld [vmem:[%s359 + $0x18] sm:$0xff]
        %v425 = vld [vmem:[%s359 + $0x20] sm:$0xff]
        %v426 = vld [vmem:[%s359 + $0x28] sm:$0xff]
        %v427 = vld [vmem:[%s359 + $0x30] sm:$0xff]
        %v428 = vld [vmem:[%s359 + $0x38] sm:$0xff]
        %v429 = vld [vmem:[%s359 + $0x40] sm:$0xff]
        %v430 = vld [vmem:[%s359 + $0x48] sm:$0xff]
        %v431 = vld [vmem:[%s359 + $0x50] sm:$0xff]
        %v432 = vld [vmem:[%s359 + $0x58] sm:$0xff]
        %v433 = vld [vmem:[%s359 + $0x60] sm:$0xff]
        %v434 = vld [vmem:[%s359 + $0x68] sm:$0xff]
        %v435 = vld [vmem:[%s359 + $0x70] sm:$0xff]
        %v436 = vld [vmem:[%s359 + $0x78] sm:$0xff]
        %v437 = vld [vmem:[%s359 + $0x80] sm:$0xff]
        %v438 = vld [vmem:[%s359 + $0x88] sm:$0xff]
        %v439 = vld [vmem:[%s359 + $0x90] sm:$0xff]
        %v440 = vld [vmem:[%s359 + $0x98] sm:$0xff]
        %v441 = vld [vmem:[%s359 + $0xa0] sm:$0xff]
        %v442 = vld [vmem:[%s359 + $0xa8] sm:$0xff]
        %v443 = vld [vmem:[%s359 + $0xb0] sm:$0xff]
        %v444 = vld [vmem:[%s359 + $0xb8] sm:$0xff]
        %v445 = vld [vmem:[%s359 + $0xc0] sm:$0xff]
        %v446 = vld [vmem:[%s359 + $0xc8] sm:$0xff]
        %v447 = vld [vmem:[%s359 + $0xd0] sm:$0xff]
        %v448 = vld [vmem:[%s359 + $0xd8] sm:$0xff]
        %v449 = vld [vmem:[%s359 + $0xe0] sm:$0xff]
        %v450 = vld [vmem:[%s359 + $0xe8] sm:$0xff]
        %v451 = vld [vmem:[%s359 + $0xf0] sm:$0xff]
        %v452 = vld [vmem:[%s359 + $0xf8] sm:$0xff]
        %453 = vmatprep.subr.mxu0 0.0
        %454 = vmatpush1.msra.mxu0 %v421
        %455 = vmatprep.subr.mxu0 0.0
        %456 = vmatpush1.msra.mxu0 %v422
        %457 = vmatprep.subr.mxu0 0.0
        %458 = vmatpush1.msra.mxu0 %v423
        %459 = vmatprep.subr.mxu0 0.0
        %460 = vmatpush1.msra.mxu0 %v424
        %461 = vmatprep.subr.mxu0 0.0
        %462 = vmatpush1.msra.mxu0 %v425
        %463 = vmatprep.subr.mxu0 0.0
        %464 = vmatpush1.msra.mxu0 %v426
        %465 = vmatprep.subr.mxu0 0.0
        %466 = vmatpush1.msra.mxu0 %v427
        %467 = vmatprep.subr.mxu0 0.0
        %468 = vmatpush1.msra.mxu0 %v428
        %469 = vmatprep.subr.mxu0 0.0
        %470 = vmatpush1.msra.mxu0 %v429
        %471 = vmatprep.subr.mxu0 0.0
        %472 = vmatpush1.msra.mxu0 %v430
        %473 = vmatprep.subr.mxu0 0.0
        %474 = vmatpush1.msra.mxu0 %v431
        %475 = vmatprep.subr.mxu0 0.0
        %476 = vmatpush1.msra.mxu0 %v432
        %477 = vmatprep.subr.mxu0 0.0
        %478 = vmatpush1.msra.mxu0 %v433
        %479 = vmatprep.subr.mxu0 0.0
        %480 = vmatpush1.msra.mxu0 %v434
        %481 = vmatprep.subr.mxu0 0.0
        %482 = vmatpush1.msra.mxu0 %v435
        %483 = vmatprep.subr.mxu0 0.0
        %484 = vmatpush1.msra.mxu0 %v436
        %485 = vmatprep.subr.mxu0 0.0
        %486 = vmatpush1.msra.mxu0 %v437
        %487 = vmatprep.subr.mxu0 0.0
        %488 = vmatpush1.msra.mxu0 %v438
        %489 = vmatprep.subr.mxu0 0.0
        %490 = vmatpush1.msra.mxu0 %v439
        %491 = vmatprep.subr.mxu0 0.0
        %492 = vmatpush1.msra.mxu0 %v440
        %493 = vmatprep.subr.mxu0 0.0
        %494 = vmatpush1.msra.mxu0 %v441
        %495 = vmatprep.subr.mxu0 0.0
        %496 = vmatpush1.msra.mxu0 %v442
        %497 = vmatprep.subr.mxu0 0.0
        %498 = vmatpush1.msra.mxu0 %v443
        %499 = vmatprep.subr.mxu0 0.0
        %500 = vmatpush1.msra.mxu0 %v444
        %501 = vmatprep.subr.mxu0 0.0
        %502 = vmatpush1.msra.mxu0 %v445
        %503 = vmatprep.subr.mxu0 0.0
        %504 = vmatpush1.msra.mxu0 %v446
        %505 = vmatprep.subr.mxu0 0.0
        %506 = vmatpush1.msra.mxu0 %v447
        %507 = vmatprep.subr.mxu0 0.0
        %508 = vmatpush1.msra.mxu0 %v448
        %509 = vmatprep.subr.mxu0 0.0
        %510 = vmatpush1.msra.mxu0 %v449
        %511 = vmatprep.subr.mxu0 0.0
        %512 = vmatpush1.msra.mxu0 %v450
        %513 = vmatprep.subr.mxu0 0.0
        %514 = vmatpush1.msra.mxu0 %v451
        %515 = vmatprep.subr.mxu0 0.0
        %516 = vmatpush1.msra.mxu0 %v452
        %517 = vmatprep.mubr.f32.mxu0 %v420
        %518 = vmatmul.mubr.f32.gmra.mrb[0].mxu0 %v419
        %v519 = vpop.f32.mrb[0].mxu0
        %v520 = vadd.f32 0.0, %v519
        %v521 = vpop.f32.mrb[0].mxu0
        %522 = vdwg.mxu0
        %v523 = vadd.f32 %v418, %v520
        %vm524 = vcmask 261120
        %525 = vst.msk [vmem:[#allocation2] sm:$0xff] %vm524, %v523
        %p526 = scmp.eq.s32.totalorder %s32, 3
        // Predicated region
        $region81: #{tpu_custom_call.1} parent=47 // pred_check
          %p527 = pneg %p526
        $region82: #{tpu_custom_call.1} parent=47 // pred_check_branch
          %529 = sbr.rel (%p527) target = $region84
        $region83: #{tpu_custom_call.1} parent=47 // pred_region
          %v530 = vld [vmem:[#allocation2] sm:$0xff]
          %v531 = vld [vmem:[#allocation8] sm:$0x1]
          %v533 = vlaneseq
          %v534 = vshrl.u32 %v533, 7
          %v535 = vsub.s32 0, %v534
          %v536 = vrot.slane %v531, %v535
          %v538 = vadd.f32 %v530, %v536
          %v539 = vmax.f32 %v538, 0.0
          %v540 = vld [vmem:[#allocation9] sm:$0xff]
          %v541 = vld [vmem:[#allocation9 + $0x8] sm:$0xff]
          %v542 = vld [vmem:[#allocation9 + $0x10] sm:$0xff]
          %v543 = vld [vmem:[#allocation9 + $0x18] sm:$0xff]
          %v544 = vld [vmem:[#allocation11] sm:$0x1]
          %v546 = vlaneseq
          %v547 = vshrl.u32 %v546, 7
          %v548 = vsub.s32 0, %v547
          %v549 = vrot.slane %v544, %v548
          %v552 = vsel %vm524, %v539, 0
          %554 = vmatprep.subr.mxu0 0.0
          %555 = vmatpush1.msra.mxu0 %v540
          %556 = vmatprep.subr.mxu0 0.0
          %557 = vmatpush1.msra.mxu0 %v541
          %558 = vmatprep.subr.mxu0 0.0
          %559 = vmatpush1.msra.mxu0 %v542
          %560 = vmatprep.subr.mxu0 0.0
          %561 = vmatpush1.msra.mxu0 %v543
          %562 = vmatprep.subr.mxu0 0.0
          %563 = vmatpush1.msra.mxu0 0.0
          %564 = vmatprep.subr.mxu0 0.0
          %565 = vmatpush1.msra.mxu0 0.0
          %566 = vmatprep.subr.mxu0 0.0
          %567 = vmatpush1.msra.mxu0 0.0
          %568 = vmatprep.subr.mxu0 0.0
          %569 = vmatpush1.msra.mxu0 0.0
          %570 = vmatprep.subr.mxu0 0.0
          %571 = vmatpush1.msra.mxu0 0.0
          %572 = vmatprep.subr.mxu0 0.0
          %573 = vmatpush1.msra.mxu0 0.0
          %574 = vmatprep.subr.mxu0 0.0
          %575 = vmatpush1.msra.mxu0 0.0
          %576 = vmatprep.subr.mxu0 0.0
          %577 = vmatpush1.msra.mxu0 0.0
          %578 = vmatprep.subr.mxu0 0.0
          %579 = vmatpush1.msra.mxu0 0.0
          %580 = vmatprep.subr.mxu0 0.0
          %581 = vmatpush1.msra.mxu0 0.0
          %582 = vmatprep.subr.mxu0 0.0
          %583 = vmatpush1.msra.mxu0 0.0
          %584 = vmatprep.subr.mxu0 0.0
          %585 = vmatpush1.msra.mxu0 0.0
          %586 = vmatprep.subr.mxu0 0.0
          %587 = vmatpush1.msra.mxu0 0.0
          %588 = vmatprep.subr.mxu0 0.0
          %589 = vmatpush1.msra.mxu0 0.0
          %590 = vmatprep.subr.mxu0 0.0
          %591 = vmatpush1.msra.mxu0 0.0
          %592 = vmatprep.subr.mxu0 0.0
          %593 = vmatpush1.msra.mxu0 0.0
          %594 = vmatprep.subr.mxu0 0.0
          %595 = vmatpush1.msra.mxu0 0.0
          %596 = vmatprep.subr.mxu0 0.0
          %597 = vmatpush1.msra.mxu0 0.0
          %598 = vmatprep.subr.mxu0 0.0
          %599 = vmatpush1.msra.mxu0 0.0
          %600 = vmatprep.subr.mxu0 0.0
          %601 = vmatpush1.msra.mxu0 0.0
          %602 = vmatprep.subr.mxu0 0.0
          %603 = vmatpush1.msra.mxu0 0.0
          %604 = vmatprep.subr.mxu0 0.0
          %605 = vmatpush1.msra.mxu0 0.0
          %606 = vmatprep.subr.mxu0 0.0
          %607 = vmatpush1.msra.mxu0 0.0
          %608 = vmatprep.subr.mxu0 0.0
          %609 = vmatpush1.msra.mxu0 0.0
          %610 = vmatprep.subr.mxu0 0.0
          %611 = vmatpush1.msra.mxu0 0.0
          %612 = vmatprep.subr.mxu0 0.0
          %613 = vmatpush1.msra.mxu0 0.0
          %614 = vmatprep.subr.mxu0 0.0
          %615 = vmatpush1.msra.mxu0 0.0
          %616 = vmatprep.subr.mxu0 0.0
          %617 = vmatpush1.msra.mxu0 0.0
          %618 = vmatprep.mubr.f32.mxu0 0.0
          %619 = vmatmul.mubr.f32.gmra.mrb[0].mxu0 %v552
          %v620 = vpop.f32.mrb[0].mxu0
          %v621 = vadd.f32 %v549, %v620
          %v622 = vpop.f32.mrb[0].mxu0
          %623 = vdwg.mxu0
          %v624 = vmax.f32 %v621, 0.0
          %v625 = vld [vmem:[#allocation12] sm:$0xff]
          %v626 = vld [vmem:[#allocation12 + $0x8] sm:$0xff]
          %v627 = vld [vmem:[#allocation12 + $0x10] sm:$0xff]
          %v628 = vld [vmem:[#allocation12 + $0x18] sm:$0xff]
          %v629 = vld [vmem:[#allocation14] sm:$0x1]
          %v631 = vlaneseq
          %v632 = vshrl.u32 %v631, 7
          %v633 = vsub.s32 0, %v632
          %v634 = vrot.slane %v629, %v633
          %v637 = vsel %vm524, %v624, 0
          %639 = vmatprep.subr.mxu0 0.0
          %640 = vmatpush1.msra.mxu0 %v625
          %641 = vmatprep.subr.mxu0 0.0
          %642 = vmatpush1.msra.mxu0 %v626
          %643 = vmatprep.subr.mxu0 0.0
          %644 = vmatpush1.msra.mxu0 %v627
          %645 = vmatprep.subr.mxu0 0.0
          %646 = vmatpush1.msra.mxu0 %v628
          %647 = vmatprep.subr.mxu0 0.0
          %648 = vmatpush1.msra.mxu0 0.0
          %649 = vmatprep.subr.mxu0 0.0
          %650 = vmatpush1.msra.mxu0 0.0
          %651 = vmatprep.subr.mxu0 0.0
          %652 = vmatpush1.msra.mxu0 0.0
          %653 = vmatprep.subr.mxu0 0.0
          %654 = vmatpush1.msra.mxu0 0.0
          %655 = vmatprep.subr.mxu0 0.0
          %656 = vmatpush1.msra.mxu0 0.0
          %657 = vmatprep.subr.mxu0 0.0
          %658 = vmatpush1.msra.mxu0 0.0
          %659 = vmatprep.subr.mxu0 0.0
          %660 = vmatpush1.msra.mxu0 0.0
          %661 = vmatprep.subr.mxu0 0.0
          %662 = vmatpush1.msra.mxu0 0.0
          %663 = vmatprep.subr.mxu0 0.0
          %664 = vmatpush1.msra.mxu0 0.0
          %665 = vmatprep.subr.mxu0 0.0
          %666 = vmatpush1.msra.mxu0 0.0
          %667 = vmatprep.subr.mxu0 0.0
          %668 = vmatpush1.msra.mxu0 0.0
          %669 = vmatprep.subr.mxu0 0.0
          %670 = vmatpush1.msra.mxu0 0.0
          %671 = vmatprep.subr.mxu0 0.0
          %672 = vmatpush1.msra.mxu0 0.0
          %673 = vmatprep.subr.mxu0 0.0
          %674 = vmatpush1.msra.mxu0 0.0
          %675 = vmatprep.subr.mxu0 0.0
          %676 = vmatpush1.msra.mxu0 0.0
          %677 = vmatprep.subr.mxu0 0.0
          %678 = vmatpush1.msra.mxu0 0.0
          %679 = vmatprep.subr.mxu0 0.0
          %680 = vmatpush1.msra.mxu0 0.0
          %681 = vmatprep.subr.mxu0 0.0
          %682 = vmatpush1.msra.mxu0 0.0
          %683 = vmatprep.subr.mxu0 0.0
          %684 = vmatpush1.msra.mxu0 0.0
          %685 = vmatprep.subr.mxu0 0.0
          %686 = vmatpush1.msra.mxu0 0.0
          %687 = vmatprep.subr.mxu0 0.0
          %688 = vmatpush1.msra.mxu0 0.0
          %689 = vmatprep.subr.mxu0 0.0
          %690 = vmatpush1.msra.mxu0 0.0
          %691 = vmatprep.subr.mxu0 0.0
          %692 = vmatpush1.msra.mxu0 0.0
          %693 = vmatprep.subr.mxu0 0.0
          %694 = vmatpush1.msra.mxu0 0.0
          %695 = vmatprep.subr.mxu0 0.0
          %696 = vmatpush1.msra.mxu0 0.0
          %697 = vmatprep.subr.mxu0 0.0
          %698 = vmatpush1.msra.mxu0 0.0
          %699 = vmatprep.subr.mxu0 0.0
          %700 = vmatpush1.msra.mxu0 0.0
          %701 = vmatprep.subr.mxu0 0.0
          %702 = vmatpush1.msra.mxu0 0.0
          %703 = vmatprep.mubr.f32.mxu0 0.0
          %704 = vmatmul.mubr.f32.gmra.mrb[0].mxu0 %v637
          %v705 = vpop.f32.mrb[0].mxu0
          %v706 = vadd.f32 %v634, %v705
          %v707 = vpop.f32.mrb[0].mxu0
          %708 = vdwg.mxu0
          %709 = vst [vmem:[#allocation15] sm:$0xff] %v706
        $region84: #{tpu_custom_call.1} parent=47 // pred_fallthru
          _
        // Predicated region
        $region85: #{tpu_custom_call.1} parent=47 // pred_check
          %p710 = pneg %p216
        $region86: #{tpu_custom_call.1} parent=47 // pred_check_branch
          %712 = sbr.rel (%p710) target = $region88
        $region87: #{tpu_custom_call.1} parent=47 // pred_region
          %s714 = ssub.s32 128, 128
          %715 = vsyncadd [#allocation5], %s714
          %s716 = smul.addr %s31, 128
          %s717 = scalar_lea.hbm %s7, %s716
          %s719 = sshll.u32 [#allocation15], 4
          %s720 = int_to_ptr.vmem [resolvable:$true] %s719
          %722 = dma.vmem_to_hbm [thread:$0]  %s720, 128, %s717, [#allocation5]
        $region88: #{tpu_custom_call.1} parent=47 // pred_fallthru
          _
        // Predicated region
        $region89: #{tpu_custom_call.1} parent=47 // pred_check
          %p723 = pneg %p216
        $region90: #{tpu_custom_call.1} parent=47 // pred_check_branch
          %725 = sbr.rel (%p723) target = $region92
        $region91: #{tpu_custom_call.1} parent=47 // pred_region
          %726 = dma.done [#allocation5], 128
        $region92: #{tpu_custom_call.1} parent=47 // pred_fallthru
          _
      $region48: #{tpu_custom_call.1} parent=5 // pred_fallthru
        _
      %p727 = scmp.le.s32.totalorder 2, %s22
      // Predicated region
      $region93: #{tpu_custom_call.1} parent=5 // pred_check
        %p728 = pneg %p727
      $region94: #{tpu_custom_call.1} parent=5 // pred_check_branch
        %730 = sbr.rel (%p728) target = $region96
      $region95: #{tpu_custom_call.1} parent=5 // pred_region
        %s731 = ssub.s32 %s22, 2
      $region96: #{tpu_custom_call.1} parent=5 // pred_fallthru
        _
    $region6: #{tpu_custom_call.1} parent=1 // loop_footer
      %s26 = sadd.s32 1, %s22
    $region7: #{tpu_custom_call.1} parent=1 // loop_footer_branch
      %21 = sbr.rel target = $region3
    $region8: #{tpu_custom_call.1} parent=1 // loop_exit
      _
    %732 = vsyncpa [#allocation4], 1
    %s733 = scalar_lea.sflag [#allocation4], 1
    %734 = vsyncpa %s733, 1
    %735 = vsyncpa [#allocation7], 1
    %s736 = scalar_lea.sflag [#allocation7], 1
    %737 = vsyncpa %s736, 1
    %738 = vsyncpa [#allocation10], 1
    %739 = vsyncpa [#allocation13], 1
    %740 = vsyncpa [#allocation5], 1
    %s741 = scalar_lea.sflag [#allocation5], 1
    %742 = vsyncpa %s741, 1

</llo_original>
